<compile_context>
chip_gen: v7x
topology: tpu7x:2x2x1
jax: 0.10.0
libtpu: 0.0.40
codegen_flags: <defaults>
</compile_context>

<pallas_src>
import jax
import jax.numpy as jnp
from jax.experimental import pallas as pl
from jax.experimental.pallas import tpu as pltpu


def _round_up(x, m):
    return ((x + m - 1) // m) * m


# -----------------------------------------------------------------------------
# Kernel 1: projection  y = x @ W + b     (the self.proj Linear; dropout p=0)
# -----------------------------------------------------------------------------
def proj_kernel(x_ref, w_ref, b_ref, o_ref):
    # bf16 MXU inputs, f32 accumulation; bias fused into the same tile write.
    acc = jnp.dot(
        x_ref[...].astype(jnp.bfloat16),
        w_ref[...].astype(jnp.bfloat16),
        preferred_element_type=jnp.float32,
    )
    o_ref[...] = acc + b_ref[...]


def proj_forward(x, w, b):
    B, C = x.shape
    D = w.shape[1]
    Bp = _round_up(B, 8)  # sublane-align the row dim
    if Bp != B:
        x = jnp.concatenate([x, jnp.zeros((Bp - B, C), x.dtype)], axis=0)
    out = pl.pallas_call(
        proj_kernel,
        out_shape=jax.ShapeDtypeStruct((Bp, D), jnp.float32),
        grid=(1,),
        in_specs=[
            pl.BlockSpec((Bp, C), lambda i: (0, 0)),
            pl.BlockSpec((C, D), lambda i: (0, 0)),
            pl.BlockSpec((1, D), lambda i: (0, 0)),
        ],
        out_specs=pl.BlockSpec((Bp, D), lambda i: (0, 0)),
    )(x, w, b)
    return out[:B]


# -----------------------------------------------------------------------------
# Kernel 2: vocab-tiled online-logsumexp LM-head cross-entropy ("flash CE")
#   grid = (N/TN, V/TV), V is the last (reduction) axis.
#   per V tile:   logits = h_tile @ W_tile   (bf16 in, f32 acc, never (N,V))
#                 running max / sum / label-logit updated online in f32 scratch
#   finalize:     per-row loss = (lse - label_logit) for valid labels, else 0
# -----------------------------------------------------------------------------
def lm_ce_kernel(tile_valid_ref, h_ref, w_ref, labels_ref,
                 loss_ref, valid_ref, m_sc, l_sc, ll_sc):
    n = pl.program_id(0)
    v = pl.program_id(1)
    nv = pl.num_programs(1)

    @pl.when(v == 0)
    def _init():
        m_sc[...] = jnp.full_like(m_sc, -jnp.inf)
        l_sc[...] = jnp.zeros_like(l_sc)
        ll_sc[...] = jnp.zeros_like(ll_sc)

    labels = labels_ref[...]  # (TN, 1) int32

    # Skip matmul + exp work for N tiles whose rows are all -100 (pad-heavy).
    @pl.when(tile_valid_ref[n] > 0)
    def _body():
        logits = jnp.dot(
            h_ref[...], w_ref[...],
            preferred_element_type=jnp.float32,
        )  # (TN, TV) f32  (bf16 MXU inputs, f32 accumulate)

        tv = logits.shape[1]
        local_lab = labels - v * tv                                   # (TN, 1)
        iota = jax.lax.broadcasted_iota(jnp.int32, logits.shape, 1)   # (TN, TV)
        # label logit contribution of this vocab tile (0 if label elsewhere
        # or -100); folded into the same pass, no one-hot materialization.
        ll_sc[...] += jnp.sum(
            jnp.where(iota == local_lab, logits, 0.0), axis=-1, keepdims=True)

        # online logsumexp (all f32)
        m_new = jnp.maximum(m_sc[...], jnp.max(logits, axis=-1, keepdims=True))
        alpha = jnp.exp(m_sc[...] - m_new)
        l_sc[...] = alpha * l_sc[...] + jnp.sum(
            jnp.exp(logits - m_new), axis=-1, keepdims=True)
        m_sc[...] = m_new

    @pl.when(v == nv - 1)
    def _finalize():
        valid = (labels != -100).astype(jnp.float32)                  # (TN, 1)
        lse = m_sc[...] + jnp.log(l_sc[...])
        loss_ref[...] = jnp.where(valid > 0, lse - ll_sc[...], 0.0)
        valid_ref[...] = valid


def lm_cross_entropy(h, w_lm, labels, *, tn=128, tv=2048):
    """h: (N, D), w_lm: (D, V), labels: (N,) int32 (-100 = ignore)."""
    N, D = h.shape
    V = w_lm.shape[1]

    # Clamp / align tile sizes to the problem and to the (8, 128) constraint.
    tn = min(_round_up(tn, 8), _round_up(N, 8))
    tv = min(tv, V)
    if tv != V:
        tv = _round_up(tv, 128)
        if tv >= V or V % tv != 0:
            tv = V  # fall back to a single vocab tile
    n_pad = (-N) % tn
    if n_pad:
        h = jnp.concatenate([h, jnp.zeros((n_pad, D), h.dtype)], axis=0)
        labels = jnp.concatenate(
            [labels, jnp.full((n_pad,), -100, labels.dtype)], axis=0)
    Np = N + n_pad
    num_n, num_v = Np // tn, V // tv

    # bf16 operands for the MXU: halves HBM streaming bytes for W (which is
    # re-streamed once per N tile) and halves the VMEM tile footprint.
    h_bf = h.astype(jnp.bfloat16)
    w_bf = w_lm.astype(jnp.bfloat16)

    labels2d = labels.reshape(Np, 1).astype(jnp.int32)
    # per-N-tile valid-label counts, scalar-prefetched into SMEM
    tile_valid = (labels2d.reshape(num_n, tn) != -100).sum(axis=1).astype(jnp.int32)

    grid_spec = pltpu.PrefetchScalarGridSpec(
        num_scalar_prefetch=1,
        grid=(num_n, num_v),
        in_specs=[
            pl.BlockSpec((tn, D), lambda n, v, tvd: (n, 0)),
            pl.BlockSpec((D, tv), lambda n, v, tvd: (0, v)),
            pl.BlockSpec((tn, 1), lambda n, v, tvd: (n, 0)),
        ],
        out_specs=(
            pl.BlockSpec((tn, 1), lambda n, v, tvd: (n, 0)),
            pl.BlockSpec((tn, 1), lambda n, v, tvd: (n, 0)),
        ),
        scratch_shapes=[
            pltpu.VMEM((tn, 1), jnp.float32),   # running max m
            pltpu.VMEM((tn, 1), jnp.float32),   # running sum l
            pltpu.VMEM((tn, 1), jnp.float32),   # running label logit
        ],
    )
    loss_rows, valid_rows = pl.pallas_call(
        lm_ce_kernel,
        out_shape=(
            jax.ShapeDtypeStruct((Np, 1), jnp.float32),
            jax.ShapeDtypeStruct((Np, 1), jnp.float32),
        ),
        grid_spec=grid_spec,
        compiler_params=pltpu.CompilerParams(
            dimension_semantics=("parallel", "arbitrary")),
    )(tile_valid, h_bf, w_bf, labels2d)

    loss_sum = jnp.sum(loss_rows)
    cnt = jnp.sum(valid_rows)
    # guard against all-ignored batches (cnt == 0 -> return 0, not NaN)
    return loss_sum / jnp.maximum(cnt, 1.0)


# -----------------------------------------------------------------------------
# Captioner forward (glue in JAX, hot paths in Pallas)
# -----------------------------------------------------------------------------
def captioner_forward(image_embs, input_ids, params, pad_token_id,
                      *, tn=128, tv=2048):
    """
    image_embs: (B, C) float32
    input_ids : (B, T) int32  (synthetic tokenizer output, pad = pad_token_id)
    returns scalar loss (float32)
    """
    B = image_embs.shape[0]
    D = params["proj_w"].shape[1]

    # proj + dropout(p=0 default -> identity), then unsqueeze(1)
    img = proj_forward(image_embs, params["proj_w"], params["proj_b"])   # (B, D)
    img = img[:, None, :]                                                # (B, 1, D)

    # token embeddings (gather — JAX glue)
    tok = jnp.take(params["emb_table"], input_ids, axis=0)               # (B, T, D)

    # concat image prefix + token embeddings
    hidden = jnp.concatenate([img, tok], axis=1)                         # (B, 1+T, D)

    # labels: -100 for image prefix and pad tokens
    labels_tok = jnp.where(input_ids == pad_token_id, -100, input_ids)
    labels_img = jnp.full((B, 1), -100, dtype=jnp.int32)
    labels = jnp.concatenate([labels_img, labels_tok], axis=1)           # (B, 1+T)

    # causal-LM shift (as done inside HF OPTForCausalLM)
    h_shift = hidden[:, :-1, :].reshape(-1, D)                           # (N, D)
    l_shift = labels[:, 1:].reshape(-1)                                  # (N,)

    return lm_cross_entropy(h_shift, params["lm_head_w"], l_shift, tn=tn, tv=tv)


# -----------------------------------------------------------------------------
# Pure-JAX reference (f32) for correctness cross-check
# -----------------------------------------------------------------------------
def reference_loss(image_embs, input_ids, params, pad_token_id):
    B = image_embs.shape[0]
    D = params["proj_w"].shape[1]
    img = image_embs @ params["proj_w"] + params["proj_b"]
    img = img[:, None, :]
    tok = jnp.take(params["emb_table"], input_ids, axis=0)
    hidden = jnp.concatenate([img, tok], axis=1)
    labels_tok = jnp.where(input_ids == pad_token_id, -100, input_ids)
    labels = jnp.concatenate(
        [jnp.full((B, 1), -100, jnp.int32), labels_tok], axis=1)
    h = hidden[:, :-1, :].reshape(-1, D)
    l = labels[:, 1:].reshape(-1)
    logits = h @ params["lm_head_w"]
    lse = jax.scipy.special.logsumexp(logits, axis=-1)
    lab_logit = jnp.take_along_axis(
        logits, jnp.maximum(l, 0)[:, None], axis=-1)[:, 0]
    valid = (l != -100)
    per = jnp.where(valid, lse - lab_logit, 0.0)
    return per.sum() / jnp.maximum(valid.sum().astype(jnp.float32), 1.0)


# -----------------------------------------------------------------------------
# Deterministic parameter init + example run
# -----------------------------------------------------------------------------
if __name__ == "__main__":
    key = jax.random.PRNGKey(0)
    k_x, k_pw, k_pb, k_emb, k_lm, k_ids = jax.random.split(key, 6)

    B = 2           # batch
    C = 32          # input_feat_dim
    D = 128         # LM embedding dim (lane-aligned synthetic stand-in for 768)
    V = 512         # vocab size (synthetic, multiple of 128 vocab tile)
    T = 16          # caption token length
    PAD = 1         # OPT pad_token_id

    params = {
        "proj_w": jax.random.normal(k_pw, (C, D), jnp.float32) * 0.02,
        "proj_b": jax.random.normal(k_pb, (1, D), jnp.float32) * 0.02,
        "emb_table": jax.random.normal(k_emb, (V, D), jnp.float32) * 0.02,
        "lm_head_w": jax.random.normal(k_lm, (D, V), jnp.float32) * 0.02,
    }

    image_embs = jax.random.normal(k_x, (B, C), jnp.float32)

    # synthetic tokenizer output, right-padded with PAD
    input_ids = jax.random.randint(k_ids, (B, T), 2, V, dtype=jnp.int32)
    lengths = jnp.array([[13], [6]], dtype=jnp.int32)
    pos = jnp.arange(T, dtype=jnp.int32)[None, :]
    input_ids = jnp.where(pos < lengths, input_ids, PAD)

    ref = jax.block_until_ready(reference_loss(image_embs, input_ids, params, PAD))

    # Default (large) tiles: single (N, V) tile at this demo size.
    loss = captioner_forward(image_embs, input_ids, params, PAD)
    loss = jax.block_until_ready(loss)
    assert jnp.isfinite(loss), "loss is not finite"
    assert jnp.allclose(loss, ref, rtol=5e-2, atol=5e-2), (loss, ref)

    # Small tiles: exercises the multi-tile online-logsumexp streaming path
    # (grid = (N/8, V/128)) including init/accumulate/finalize phases.
    loss_tiled = captioner_forward(image_embs, input_ids, params, PAD, tn=8, tv=128)
    loss_tiled = jax.block_until_ready(loss_tiled)
    assert jnp.isfinite(loss_tiled), "tiled loss is not finite"
    assert jnp.allclose(loss_tiled, ref, rtol=5e-2, atol=5e-2), (loss_tiled, ref)

    print("KERNEL_OK")
</pallas_src>

<mosaic_0001>
module attributes {stable_mosaic.version = 11 : i64} {
  func.func @proj_kernel(%arg0: i32, %arg1: memref<8x32xf32, #tpu.memory_space<vmem>>, %arg2: memref<32x128xf32, #tpu.memory_space<vmem>>, %arg3: memref<1x128xf32, #tpu.memory_space<vmem>>, %arg4: memref<8x128xf32, #tpu.memory_space<vmem>>) attributes {dimension_semantics = [#tpu.dimension_semantics<arbitrary>], iteration_bounds = array<i64: 1>, scalar_prefetch = 0 : i64, scratch_operands = 0 : i64, tpu.core_type = #tpu.core_type<tc>, window_params = [{pipeline_mode = #tpu.pipeline_mode<synchronous>, transform_indices = @transform_0, window_bounds = array<i64: 8, 32>}, {pipeline_mode = #tpu.pipeline_mode<synchronous>, transform_indices = @transform_1, window_bounds = array<i64: 32, 128>}, {pipeline_mode = #tpu.pipeline_mode<synchronous>, transform_indices = @transform_2, window_bounds = array<i64: 1, 128>}, {pipeline_mode = #tpu.pipeline_mode<synchronous>, transform_indices = @transform_3, window_bounds = array<i64: 8, 128>}]} {
    %c0 = arith.constant 0 : index
    %c0_0 = arith.constant 0 : index
    %0 = vector.load %arg1[%c0, %c0_0] : memref<8x32xf32, #tpu.memory_space<vmem>>, vector<8x32xf32>
    %1 = arith.truncf %0 : vector<8x32xf32> to vector<8x32xbf16>
    %c0_1 = arith.constant 0 : index
    %c0_2 = arith.constant 0 : index
    %2 = vector.load %arg2[%c0_1, %c0_2] : memref<32x128xf32, #tpu.memory_space<vmem>>, vector<32x128xf32>
    %3 = arith.truncf %2 : vector<32x128xf32> to vector<32x128xbf16>
    %cst = arith.constant dense<0.000000e+00> : vector<8x128xf32>
    %4 = tpu.matmul %1, %3, %cst {dimension_numbers = #tpu.dot_dimension_numbers<[1], [0], [0], [1], [0, 0, 1, 1], [], []>} : vector<8x32xbf16>, vector<32x128xbf16>, vector<8x128xf32> -> vector<8x128xf32>
    %c0_3 = arith.constant 0 : index
    %c0_4 = arith.constant 0 : index
    %5 = vector.load %arg3[%c0_3, %c0_4] : memref<1x128xf32, #tpu.memory_space<vmem>>, vector<1x128xf32>
    %6 = vector.broadcast %5 : vector<1x128xf32> to vector<8x128xf32>
    %7 = arith.addf %4, %6 : vector<8x128xf32>
    %c0_5 = arith.constant 0 : index
    %c0_6 = arith.constant 0 : index
    %8 = vector.load %arg4[%c0_5, %c0_6] : memref<8x128xf32, #tpu.memory_space<vmem>>, vector<8x128xf32>
    tpu.vector_store %arg4[%c0_5, %c0_6], %7 {strides = array<i32>} : memref<8x128xf32, #tpu.memory_space<vmem>>, vector<8x128xf32>,
    return
  }
  func.func @transform_0(%arg0: i32) -> (i32, i32) {
    %c0_i32 = arith.constant 0 : i32
    %c0_i32_0 = arith.constant 0 : i32
    %c0_i32_1 = arith.constant 0 : i32
    return %c0_i32, %c0_i32_0 : i32, i32
  }
  func.func @transform_1(%arg0: i32) -> (i32, i32) {
    %c0_i32 = arith.constant 0 : i32
    %c0_i32_0 = arith.constant 0 : i32
    %c0_i32_1 = arith.constant 0 : i32
    return %c0_i32, %c0_i32_0 : i32, i32
  }
  func.func @transform_2(%arg0: i32) -> (i32, i32) {
    %c0_i32 = arith.constant 0 : i32
    %c0_i32_0 = arith.constant 0 : i32
    %c0_i32_1 = arith.constant 0 : i32
    return %c0_i32, %c0_i32_0 : i32, i32
  }
  func.func @transform_3(%arg0: i32) -> (i32, i32) {
    %c0_i32 = arith.constant 0 : i32
    %c0_i32_0 = arith.constant 0 : i32
    %c0_i32_1 = arith.constant 0 : i32
    return %c0_i32, %c0_i32_0 : i32, i32
  }
}

</mosaic_0001>

<llo_original>
// kernel: tpu_custom_call.1
$region0: #{tpu_custom_call.1}
  #allocation0 [shape = 'u32[]', space=smem, size = 0x4, offset = 0x4, fixed_abs, tag = 'smem constant byte address 0x4 - core index']
  #allocation1 [shape = 'u32[144,128]{1,0:T(1,128)}', space=vmem, size = 0x12000, scoped, tag = 'internal scratch']
  %s0 = inlined_call_operand.hbm [shape: f32[8,32], index: 0, kind: input, shape index: {}]
  %s1 = inlined_call_operand.hbm [shape: f32[32,128], index: 1, kind: input, shape index: {}]
  %s2 = inlined_call_operand.vmem [shape: f32[1,128], index: 2, kind: input, shape index: {}]
  %s3 = inlined_call_operand.hbm [shape: f32[8,128], index: 3, kind: output, shape index: {}]
  %s4 = sld [smem:[#allocation0]]
  $region30: #{tpu_custom_call.1} parent=0
    _
  %s6 = ssub.s32 1, %s4
  %s7 = scalar_select 0, %s6, %s4
  $region1: #{tpu_custom_call.1} parent=0
    #allocation2 [shape = 'u8[4096]{0}', space=vmem, size = 0x1000, scoped, tag = 'input window, operand 0, single buffered']
    #allocation3 [shape = 's32[1]{0}', space=sflag, size = 0x4, scoped, tag = 'scoped memory for tpu_custom_call.1']
    #allocation4 [shape = 's32[1]{0}', space=sflag, size = 0x4, scoped, tag = 'scoped memory for tpu_custom_call.1']
    #allocation5 [shape = 'u8[16384]{0}', space=vmem, size = 0x4000, scoped, tag = 'input window, operand 1, single buffered']
    #allocation6 [shape = 's32[1]{0}', space=sflag, size = 0x4, scoped, tag = 'scoped memory for tpu_custom_call.1']
    #allocation7 [shape = 'u8[4096]{0}', space=vmem, size = 0x1000, scoped, tag = 'output window, operand 0, single buffered']
    %8 = vsyncpa [#allocation3], 0
    %9 = vsyncpa [#allocation6], 0
    %10 = vsyncpa [#allocation4], 0
    // Predicated region
    $region2: #{tpu_custom_call.1} parent=1 // pred_check
      _
    $region3: #{tpu_custom_call.1} parent=1 // pred_check_branch
      %12 = sbr.rel (0) target = $region5
    $region4: #{tpu_custom_call.1} parent=1 // pred_region
      %s14 = ssub.s32 128, 128
      %15 = vsyncadd [#allocation3], %s14
      %s17 = sshll.u32 [#allocation2], 4
      %s18 = int_to_ptr.vmem [resolvable:$true] %s17
      %20 = dma.hbm_to_vmem [thread:$0]  %s0, 128, %s18, [#allocation3]
    $region5: #{tpu_custom_call.1} parent=1 // pred_fallthru
      _
    // Predicated region
    $region6: #{tpu_custom_call.1} parent=1 // pred_check
      _
    $region7: #{tpu_custom_call.1} parent=1 // pred_check_branch
      %22 = sbr.rel (0) target = $region9
    $region8: #{tpu_custom_call.1} parent=1 // pred_region
      %s24 = ssub.s32 512, 512
      %25 = vsyncadd [#allocation6], %s24
      %s26 = sshll.u32 [#allocation5], 4
      %s27 = int_to_ptr.vmem [resolvable:$true] %s26
      %32 = dma.hbm_to_vmem [thread:$0]  %s1, 512, %s27, [#allocation6], 128, 128, 8
    $region9: #{tpu_custom_call.1} parent=1 // pred_fallthru
      _
    // Predicated region
    $region10: #{tpu_custom_call.1} parent=1 // pred_check
      _
    $region11: #{tpu_custom_call.1} parent=1 // pred_check_branch
      %34 = sbr.rel (0) target = $region13
    $region12: #{tpu_custom_call.1} parent=1 // pred_region
      _
    $region13: #{tpu_custom_call.1} parent=1 // pred_fallthru
      _
    // Predicated region
    $region14: #{tpu_custom_call.1} parent=1 // pred_check
      _
    $region15: #{tpu_custom_call.1} parent=1 // pred_check_branch
      %36 = sbr.rel (0) target = $region17
    $region16: #{tpu_custom_call.1} parent=1 // pred_region
      %37 = dma.done [#allocation3], 128
    $region17: #{tpu_custom_call.1} parent=1 // pred_fallthru
      _
    // Predicated region
    $region18: #{tpu_custom_call.1} parent=1 // pred_check
      _
    $region19: #{tpu_custom_call.1} parent=1 // pred_check_branch
      %39 = sbr.rel (0) target = $region21
    $region20: #{tpu_custom_call.1} parent=1 // pred_region
      %40 = dma.done [#allocation6], 512
    $region21: #{tpu_custom_call.1} parent=1 // pred_fallthru
      _
    %v42 = vld [vmem:[#allocation2] sm:$0xff]
    %v43 = vpack.c.bf16 %v42, %v42
    %v44 = vld [vmem:[#allocation5] sm:$0xff]
    %v45 = vld [vmem:[#allocation5 + $0x8] sm:$0xff]
    %v46 = vld [vmem:[#allocation5 + $0x10] sm:$0xff]
    %v47 = vld [vmem:[#allocation5 + $0x18] sm:$0xff]
    %v48 = vpack.c.bf16 %v45, %v44
    %v49 = vpack.c.bf16 %v47, %v46
    %v50 = vld [vmem:[%s2] sm:$0x1]
    %v52 = vlaneseq
    %v53 = vshrl.u32 %v52, 7
    %v54 = vsub.s32 0, %v53
    %v55 = vrot.slane %v50, %v54
    %vm57 = vcmask 261120
    %v59 = vsel %vm57, %v43, 0
    %61 = vmatprep.subr.bf16.mxu0 0
    %62 = vmatpush1.bf16.msra.mxu0 %v48
    %63 = vmatprep.subr.bf16.mxu0 0
    %64 = vmatpush1.bf16.msra.mxu0 %v49
    %65 = vmatprep.subr.bf16.mxu0 0
    %66 = vmatpush1.bf16.msra.mxu0 0
    %67 = vmatprep.subr.bf16.mxu0 0
    %68 = vmatpush1.bf16.msra.mxu0 0
    %69 = vmatprep.subr.bf16.mxu0 0
    %70 = vmatpush1.bf16.msra.mxu0 0
    %71 = vmatprep.subr.bf16.mxu0 0
    %72 = vmatpush1.bf16.msra.mxu0 0
    %73 = vmatprep.subr.bf16.mxu0 0
    %74 = vmatpush1.bf16.msra.mxu0 0
    %75 = vmatprep.subr.bf16.mxu0 0
    %76 = vmatpush1.bf16.msra.mxu0 0
    %77 = vmatprep.subr.bf16.mxu0 0
    %78 = vmatpush1.bf16.msra.mxu0 0
    %79 = vmatprep.subr.bf16.mxu0 0
    %80 = vmatpush1.bf16.msra.mxu0 0
    %81 = vmatprep.subr.bf16.mxu0 0
    %82 = vmatpush1.bf16.msra.mxu0 0
    %83 = vmatprep.subr.bf16.mxu0 0
    %84 = vmatpush1.bf16.msra.mxu0 0
    %85 = vmatprep.subr.bf16.mxu0 0
    %86 = vmatpush1.bf16.msra.mxu0 0
    %87 = vmatprep.subr.bf16.mxu0 0
    %88 = vmatpush1.bf16.msra.mxu0 0
    %89 = vmatprep.subr.bf16.mxu0 0
    %90 = vmatpush1.bf16.msra.mxu0 0
    %91 = vmatprep.subr.bf16.mxu0 0
    %92 = vmatpush1.bf16.msra.mxu0 0
    %93 = vmatprep.mubr.bf16.mxu0 0
    %94 = vmatmul.mubr.bf16.gmra.mrb[0].mxu0 %v59
    %v95 = vpop.f32.mrb[0].mxu0
    %v96 = vadd.f32 %v55, %v95
    %v97 = vpop.f32.mrb[0].mxu0
    %v98 = vpop.f32.mrb[0].mxu0
    %v99 = vpop.f32.mrb[0].mxu0
    %100 = vdwg.mxu0
    %101 = vst [vmem:[#allocation7] sm:$0xff] %v96
    // Predicated region
    $region22: #{tpu_custom_call.1} parent=1 // pred_check
      _
    $region23: #{tpu_custom_call.1} parent=1 // pred_check_branch
      %103 = sbr.rel (0) target = $region25
    $region24: #{tpu_custom_call.1} parent=1 // pred_region
      %s105 = ssub.s32 128, 128
      %106 = vsyncadd [#allocation4], %s105
      %s108 = sshll.u32 [#allocation7], 4
      %s109 = int_to_ptr.vmem [resolvable:$true] %s108
      %111 = dma.vmem_to_hbm [thread:$0]  %s109, 128, %s3, [#allocation4]
    $region25: #{tpu_custom_call.1} parent=1 // pred_fallthru
      _
    // Predicated region
    $region26: #{tpu_custom_call.1} parent=1 // pred_check
      _
    $region27: #{tpu_custom_call.1} parent=1 // pred_check_branch
      %113 = sbr.rel (0) target = $region29
    $region28: #{tpu_custom_call.1} parent=1 // pred_region
      %114 = dma.done [#allocation4], 128
    $region29: #{tpu_custom_call.1} parent=1 // pred_fallthru
      _
    %115 = vsyncpa [#allocation3], 1
    %116 = vsyncpa [#allocation6], 1
    %117 = vsyncpa [#allocation4], 1

</llo_original>
